<compile_context>
chip_gen: v7x
topology: tpu7x:2x2x1
jax: 0.10.0
libtpu: 0.0.40
codegen_flags: <defaults>
</compile_context>

<pallas_src>
import functools

import jax
import jax.numpy as jnp
from jax import lax
from jax.experimental import pallas as pl
from jax.experimental.pallas import tpu as pltpu

NEG_FILL = -1000000000.0


def _vmem_budgets():
    """Generation-aware (vmem_limit_bytes, per-step tile budget) in bytes."""
    cap = 64 * 1024 * 1024  # conservative fallback (v7x per-TC VMEM)
    try:
        cap = int(getattr(pltpu.get_tpu_info(), "vmem_capacity_bytes", cap))
    except Exception:
        pass
    limit = min((cap * 5) // 8, 64 * 1024 * 1024)  # ~40 MiB on v7x, 64 MiB on v5e/v6e
    return limit, (limit * 2) // 5                 # ~16 MiB / ~25 MiB working-set budget


def _choose_tq(Lq, Lk, Dk, Dv, attn_bytes, budget):
    """Largest multiple-of-32 query tile that divides Lq and fits the VMEM budget."""
    for tq in (512, 256, 128, 64, 32):
        if Lq % tq != 0:
            continue
        # double-buffered pipeline buffers: q, k, v, out (f32) + optional attn tile
        bufs = 2 * (4 * (tq * Dk + Lk * Dk + Lk * Dv + tq * Dv) + attn_bytes * tq * Lk)
        # live (TQ, Lk) temporaries in the body: s / e / p in f32 + bf16 copy of p
        temps = tq * Lk * (3 * 4 + 2)
        if bufs + temps <= budget:
            return tq
    return Lq  # tiny / odd Lq: single full-extent tile (always a legal block)


def _masked_scores(q_blk, k_blk, mask_blk, inv_temp, mm_dtype):
    # (TQ, Dk) x (Lk, Dk) -> (TQ, Lk): contract last dims directly (same pattern as
    # the reference flash-attention TPU kernel). Pre-transposing K in HBM is only
    # worth it if a bundle dump shows per-step XLU transposes of the resident block.
    qs = (q_blk * inv_temp).astype(mm_dtype)
    s = lax.dot_general(qs, k_blk.astype(mm_dtype),
                        (((1,), (1,)), ((), ())),
                        preferred_element_type=jnp.float32)
    if mask_blk is not None:
        s = jnp.where(mask_blk == 0, NEG_FILL, s)
    return s


def _min_kernel(*refs, inv_temp, has_mask):
    # Exact-parity mode only: per-(b,h) min of masked scores; scores never hit HBM.
    q_ref, k_ref = refs[0], refs[1]
    idx = 2
    mask_ref = None
    if has_mask:
        mask_ref = refs[idx]
        idx += 1
    min_ref = refs[idx]
    acc_ref = refs[idx + 1]

    i = pl.program_id(2)

    @pl.when(i == 0)
    def _():
        acc_ref[...] = jnp.full_like(acc_ref, jnp.inf)

    mask_blk = mask_ref[0, 0] if has_mask else None
    s = _masked_scores(q_ref[0, 0], k_ref[0, 0], mask_blk, inv_temp, jnp.float32)
    tile_min = jnp.min(jnp.min(s, axis=-1, keepdims=True), axis=0, keepdims=True)
    acc_ref[...] = jnp.minimum(acc_ref[...], tile_min)

    @pl.when(i == pl.num_programs(2) - 1)
    def _():
        min_ref[0, 0] = acc_ref[...]


def _attend_kernel(*refs, inv_temp, has_mask, has_gmin, emit_attn, mm_dtype):
    idx = 0
    gmin_ref = None
    if has_gmin:
        gmin_ref = refs[idx]
        idx += 1
    q_ref, k_ref, v_ref = refs[idx], refs[idx + 1], refs[idx + 2]
    idx += 3
    mask_ref = None
    if has_mask:
        mask_ref = refs[idx]
        idx += 1
    out_ref = refs[idx]
    idx += 1
    attn_ref = refs[idx] if emit_attn else None

    mask_blk = mask_ref[0, 0] if has_mask else None
    s = _masked_scores(q_ref[0, 0], k_ref[0, 0], mask_blk, inv_temp, mm_dtype)

    # attn = scores / |global_min| followed by F.normalize(dim=-1) collapses into a
    # single rescale: the positive scalar g cancels inside the L2 normalize except
    # through the eps clamp, which folds into the clamp value:
    #   (s/g) / max(||s/g||, 1e-12)  ==  s * rsqrt(max(sum(s*s), (1e-12*g)^2))
    # Fast path (has_gmin=False) takes g == 1; identical except for rows with
    # ||s|| < 1e-12*g, which do not occur with the -1e9 mask fill / real data.
    sumsq = jnp.sum(s * s, axis=-1, keepdims=True)
    if has_gmin:
        g = jnp.abs(gmin_ref[0, 0])
        clamp = (1e-12 * g) * (1e-12 * g)
    else:
        clamp = 1e-24
    a = s * lax.rsqrt(jnp.maximum(sumsq, clamp))

    # softmax(dim=-1); approx reciprocal runs on the EUP slot (within 1e-3 of exact).
    m = jnp.max(a, axis=-1, keepdims=True)
    e = jnp.exp(a - m)
    # TODO(synk): on v6e/v7x a bf16 exp would relieve the single EUP if it saturates.
    p = e * pl.reciprocal(jnp.sum(e, axis=-1, keepdims=True), approx=True)
    # TODO(synk): nn.Dropout(0.1) is identity in eval mode; not applied stochastically.

    if emit_attn:
        attn_ref[0, 0] = p.astype(attn_ref.dtype)
    out_ref[0, 0] = jnp.dot(p.astype(mm_dtype), v_ref[0, 0].astype(mm_dtype),
                            preferred_element_type=jnp.float32).astype(out_ref.dtype)


def attention_forward(q, k, v, mask=None, *, temperature,
                      return_attn=True,
                      attn_dtype=jnp.bfloat16,   # returned attn matrix dtype
                      mm_dtype=jnp.bfloat16,     # MXU operand dtype (f32 accumulate)
                      exact_min_scale=False):    # re-enable the global-min pass
    B, H, Lq, Dk = q.shape
    Lk = k.shape[2]
    Dv = v.shape[3]
    inv_temp = 1.0 / float(temperature)
    has_mask = mask is not None

    vmem_limit, tile_budget = _vmem_budgets()
    attn_bytes = jnp.dtype(attn_dtype).itemsize if return_attn else 0
    TQ = _choose_tq(Lq, Lk, Dk, Dv, attn_bytes, tile_budget)
    nq = Lq // TQ

    q_spec = pl.BlockSpec((1, 1, TQ, Dk), lambda b, h, i: (b, h, i, 0))
    k_spec = pl.BlockSpec((1, 1, Lk, Dk), lambda b, h, i: (b, h, 0, 0))
    v_spec = pl.BlockSpec((1, 1, Lk, Dv), lambda b, h, i: (b, h, 0, 0))
    # TODO(synk): for very long Lk on v7x (64 MiB/TC), tile Lk (running min in pass 1,
    # two-pass online normalize/softmax in pass 2) instead of holding full K/V blocks
    # and the (TQ, Lk) score temporaries in VMEM.

    mask_args, mask_specs = [], []
    if has_mask:
        mask = jnp.asarray(mask)
        if mask.ndim != 4:
            raise ValueError("mask must be 4-D and broadcastable to (B, H, Lq, Lk)")
        Bm, Hm, Lqm, Lkm = mask.shape
        for got, full in ((Bm, B), (Hm, H), (Lqm, Lq), (Lkm, Lk)):
            if got not in (1, full):
                raise ValueError("mask not broadcastable to attention shape")
        # keep broadcastable shape, shrink to 1 byte/elem — no (B,H,Lq,Lk) int32 blow-up
        mask_i8 = (mask != 0).astype(jnp.int8)
        mq_blk = TQ if Lqm == Lq else 1

        def mask_index_map(b, h, i):
            return (b if Bm != 1 else 0,
                    h if Hm != 1 else 0,
                    i if Lqm != 1 else 0,
                    0)

        mask_specs = [pl.BlockSpec((1, 1, mq_blk, Lkm), mask_index_map)]
        mask_args = [mask_i8]

    cparams = pltpu.CompilerParams(
        # q-tile axis stays "arbitrary" so the resident K/V block is reused across
        # q-tiles per TensorCore (avoids duplicate K/V DMA across v7x cores).
        dimension_semantics=("parallel", "parallel", "arbitrary"),
        vmem_limit_bytes=vmem_limit)

    gmin_args, gmin_specs = [], []
    if exact_min_scale:
        bh_min = pl.pallas_call(
            functools.partial(_min_kernel, inv_temp=inv_temp, has_mask=has_mask),
            out_shape=jax.ShapeDtypeStruct((B, H, 1, 1), jnp.float32),
            grid=(B, H, nq),
            in_specs=[q_spec, k_spec] + mask_specs,
            out_specs=pl.BlockSpec((1, 1, 1, 1), lambda b, h, i: (b, h, 0, 0)),
            scratch_shapes=[pltpu.VMEM((1, 1), jnp.float32)],
            compiler_params=cparams,
        )(q, k, *mask_args)
        gmin = jnp.min(bh_min).reshape(1, 1).astype(jnp.float32)
        gmin_args = [gmin]
        gmin_specs = [pl.BlockSpec(memory_space=pltpu.MemorySpace.SMEM)]

    out_shapes = [jax.ShapeDtypeStruct((B, H, Lq, Dv), q.dtype)]
    out_specs = [pl.BlockSpec((1, 1, TQ, Dv), lambda b, h, i: (b, h, i, 0))]
    # TODO(synk): when Dv < 128 and return_attn=False, a lane-dense output layout
    # (fold heads into the last dim / multiple heads per grid step) avoids masked vst
    # on the only write stream.
    if return_attn:
        out_shapes.append(jax.ShapeDtypeStruct((B, H, Lq, Lk), attn_dtype))
        out_specs.append(pl.BlockSpec((1, 1, TQ, Lk), lambda b, h, i: (b, h, i, 0)))

    res = pl.pallas_call(
        functools.partial(_attend_kernel, inv_temp=inv_temp, has_mask=has_mask,
                          has_gmin=exact_min_scale, emit_attn=return_attn,
                          mm_dtype=mm_dtype),
        out_shape=tuple(out_shapes),
        grid=(B, H, nq),
        in_specs=gmin_specs + [q_spec, k_spec, v_spec] + mask_specs,
        out_specs=tuple(out_specs),
        compiler_params=cparams,
    )(*gmin_args, q, k, v, *mask_args)

    out = res[0]
    attn = res[1] if return_attn else None
    return out, attn, q


def _reference(q, k, v, mask, temperature):
    attn = jnp.matmul(q / temperature, jnp.swapaxes(k, 2, 3))
    if mask is not None:
        attn = jnp.where(mask == 0, NEG_FILL, attn)
    attn = attn / jnp.abs(jnp.min(attn))
    nrm = jnp.sqrt(jnp.sum(attn * attn, axis=-1, keepdims=True))
    attn = attn / jnp.maximum(nrm, 1e-12)
    attn = jax.nn.softmax(attn, axis=-1)
    out = jnp.matmul(attn, v)
    return out, attn, q


if __name__ == "__main__":
    B, H, Lq, Lk, Dk, Dv = 2, 2, 128, 128, 64, 64
    temperature = float(Dk) ** 0.5

    key = jax.random.PRNGKey(0)
    kq, kk, kv = jax.random.split(key, 3)
    q = jax.random.normal(kq, (B, H, Lq, Dk), dtype=jnp.float32)
    k = jax.random.normal(kk, (B, H, Lk, Dk), dtype=jnp.float32)
    v = jax.random.normal(kv, (B, H, Lk, Dv), dtype=jnp.float32)

    mask = jnp.broadcast_to(
        jnp.tril(jnp.ones((Lq, Lk), dtype=jnp.int32)), (B, 1, Lq, Lk))

    # Fast default path: no global-min pass, bf16 MXU operands, bf16 attn output.
    for m in (None, mask):
        out, attn, q_out = attention_forward(q, k, v, mask=m,
                                             temperature=temperature)
        jax.block_until_ready((out, attn, q_out))
        ref_out, ref_attn, _ = _reference(q, k, v, m, temperature)
        assert out.dtype == q.dtype
        assert jnp.allclose(out, ref_out, rtol=1e-2, atol=2e-3)
        assert jnp.allclose(attn.astype(jnp.float32), ref_attn, rtol=1e-2, atol=2e-3)
        assert jnp.array_equal(q_out, q)

    # Exact-parity path: explicit global-min pass, f32 MXU operands, f32 attn output.
    out_e, attn_e, _ = attention_forward(
        q, k, v, mask=mask, temperature=temperature,
        attn_dtype=jnp.float32, mm_dtype=jnp.float32, exact_min_scale=True)
    jax.block_until_ready((out_e, attn_e))
    ref_out_m, ref_attn_m, _ = _reference(q, k, v, mask, temperature)
    assert jnp.allclose(out_e, ref_out_m, rtol=1e-3, atol=1e-3)
    assert jnp.allclose(attn_e, ref_attn_m, rtol=1e-3, atol=1e-3)

    print("KERNEL_OK")
</pallas_src>

<mosaic_0001>
module attributes {stable_mosaic.version = 11 : i64} {
  func.func @_attend_kernel(%arg0: i32, %arg1: i32, %arg2: i32, %arg3: memref<1x1x128x64xf32, #tpu.memory_space<vmem>>, %arg4: memref<1x1x128x64xf32, #tpu.memory_space<vmem>>, %arg5: memref<1x1x128x64xf32, #tpu.memory_space<vmem>>, %arg6: memref<1x1x128x64xf32, #tpu.memory_space<vmem>>, %arg7: memref<1x1x128x128xbf16, #tpu.memory_space<vmem>>) attributes {dimension_semantics = [#tpu.dimension_semantics<parallel>, #tpu.dimension_semantics<parallel>, #tpu.dimension_semantics<arbitrary>], iteration_bounds = array<i64: 2, 2, 1>, scalar_prefetch = 0 : i64, scratch_operands = 0 : i64, tpu.core_type = #tpu.core_type<tc>, window_params = [{transform_indices = @transform_0, window_bounds = array<i64: 1, 1, 128, 64>}, {transform_indices = @transform_1, window_bounds = array<i64: 1, 1, 128, 64>}, {transform_indices = @transform_2, window_bounds = array<i64: 1, 1, 128, 64>}, {transform_indices = @transform_3, window_bounds = array<i64: 1, 1, 128, 64>}, {transform_indices = @transform_4, window_bounds = array<i64: 1, 1, 128, 128>}]} {
    %c0 = arith.constant 0 : index
    %c0_0 = arith.constant 0 : index
    %c0_1 = arith.constant 0 : index
    %c0_2 = arith.constant 0 : index
    %0 = vector.load %arg3[%c0, %c0_0, %c0_1, %c0_2] : memref<1x1x128x64xf32, #tpu.memory_space<vmem>>, vector<1x1x128x64xf32>
    %1 = vector.shape_cast %0 : vector<1x1x128x64xf32> to vector<128x64xf32>
    %c0_3 = arith.constant 0 : index
    %c0_4 = arith.constant 0 : index
    %c0_5 = arith.constant 0 : index
    %c0_6 = arith.constant 0 : index
    %2 = vector.load %arg4[%c0_3, %c0_4, %c0_5, %c0_6] : memref<1x1x128x64xf32, #tpu.memory_space<vmem>>, vector<1x1x128x64xf32>
    %3 = vector.shape_cast %2 : vector<1x1x128x64xf32> to vector<128x64xf32>
    %cst = arith.constant 1.250000e-01 : f32
    %4 = vector.broadcast %cst : f32 to vector<128x64xf32>
    %5 = arith.mulf %1, %4 : vector<128x64xf32>
    %6 = arith.truncf %5 : vector<128x64xf32> to vector<128x64xbf16>
    %7 = arith.truncf %3 : vector<128x64xf32> to vector<128x64xbf16>
    %cst_7 = arith.constant dense<0.000000e+00> : vector<128x128xf32>
    %8 = tpu.matmul %6, %7, %cst_7 {dimension_numbers = #tpu.dot_dimension_numbers<[1], [1], [0], [0], [0, 0, 1, 0], [], []>} : vector<128x64xbf16>, vector<128x64xbf16>, vector<128x128xf32> -> vector<128x128xf32>
    %9 = arith.mulf %8, %8 : vector<128x128xf32>
    %cst_8 = arith.constant dense<0.000000e+00> : vector<128xf32>
    %10 = vector.multi_reduction <add>, %9, %cst_8 [1] : vector<128x128xf32> to vector<128xf32>
    %11 = vector.shape_cast %10 : vector<128xf32> to vector<128x1xf32>
    %cst_9 = arith.constant 1.000000e-24 : f32
    %12 = vector.broadcast %cst_9 : f32 to vector<128x1xf32>
    %13 = arith.maximumf %11, %12 : vector<128x1xf32>
    %14 = math.rsqrt %13 : vector<128x1xf32>
    %15 = vector.broadcast %14 : vector<128x1xf32> to vector<128x128xf32>
    %16 = arith.mulf %8, %15 : vector<128x128xf32>
    %cst_10 = arith.constant dense<0xFF800000> : vector<128xf32>
    %17 = vector.multi_reduction <maximumf>, %16, %cst_10 [1] : vector<128x128xf32> to vector<128xf32>
    %18 = vector.shape_cast %17 : vector<128xf32> to vector<128x1xf32>
    %19 = vector.broadcast %18 : vector<128x1xf32> to vector<128x128xf32>
    %20 = arith.subf %16, %19 : vector<128x128xf32>
    %21 = math.exp %20 : vector<128x128xf32>
    %cst_11 = arith.constant dense<0.000000e+00> : vector<128xf32>
    %22 = vector.multi_reduction <add>, %21, %cst_11 [1] : vector<128x128xf32> to vector<128xf32>
    %23 = vector.shape_cast %22 : vector<128xf32> to vector<128x1xf32>
    %24 = tpu.reciprocal %23 {approx = true} : vector<128x1xf32> -> vector<128x1xf32>
    %25 = vector.broadcast %24 : vector<128x1xf32> to vector<128x128xf32>
    %26 = arith.mulf %21, %25 : vector<128x128xf32>
    %27 = arith.truncf %26 : vector<128x128xf32> to vector<128x128xbf16>
    %c0_12 = arith.constant 0 : index
    %c0_13 = arith.constant 0 : index
    %c0_14 = arith.constant 0 : index
    %c0_15 = arith.constant 0 : index
    %28 = vector.load %arg7[%c0_12, %c0_13, %c0_14, %c0_15] : memref<1x1x128x128xbf16, #tpu.memory_space<vmem>>, vector<1x1x128x128xbf16>
    %29 = vector.shape_cast %28 : vector<1x1x128x128xbf16> to vector<128x128xbf16>
    %30 = vector.shape_cast %27 : vector<128x128xbf16> to vector<1x1x128x128xbf16>
    tpu.vector_store %arg7[%c0_12, %c0_13, %c0_14, %c0_15], %30 {strides = array<i32>} : memref<1x1x128x128xbf16, #tpu.memory_space<vmem>>, vector<1x1x128x128xbf16>,
    %31 = arith.truncf %26 : vector<128x128xf32> to vector<128x128xbf16>
    %c0_16 = arith.constant 0 : index
    %c0_17 = arith.constant 0 : index
    %c0_18 = arith.constant 0 : index
    %c0_19 = arith.constant 0 : index
    %32 = vector.load %arg5[%c0_16, %c0_17, %c0_18, %c0_19] : memref<1x1x128x64xf32, #tpu.memory_space<vmem>>, vector<1x1x128x64xf32>
    %33 = vector.shape_cast %32 : vector<1x1x128x64xf32> to vector<128x64xf32>
    %34 = arith.truncf %33 : vector<128x64xf32> to vector<128x64xbf16>
    %cst_20 = arith.constant dense<0.000000e+00> : vector<128x64xf32>
    %35 = tpu.matmul %31, %34, %cst_20 {dimension_numbers = #tpu.dot_dimension_numbers<[1], [0], [0], [1], [0, 0, 1, 1], [], []>} : vector<128x128xbf16>, vector<128x64xbf16>, vector<128x64xf32> -> vector<128x64xf32>
    %c0_21 = arith.constant 0 : index
    %c0_22 = arith.constant 0 : index
    %c0_23 = arith.constant 0 : index
    %c0_24 = arith.constant 0 : index
    %36 = vector.load %arg6[%c0_21, %c0_22, %c0_23, %c0_24] : memref<1x1x128x64xf32, #tpu.memory_space<vmem>>, vector<1x1x128x64xf32>
    %37 = vector.shape_cast %36 : vector<1x1x128x64xf32> to vector<128x64xf32>
    %38 = vector.shape_cast %35 : vector<128x64xf32> to vector<1x1x128x64xf32>
    tpu.vector_store %arg6[%c0_21, %c0_22, %c0_23, %c0_24], %38 {strides = array<i32>} : memref<1x1x128x64xf32, #tpu.memory_space<vmem>>, vector<1x1x128x64xf32>,
    return
  }
  func.func @transform_0(%arg0: i32, %arg1: i32, %arg2: i32) -> (i32, i32, i32, i32) {
    %c0_i32 = arith.constant 0 : i32
    %c0_i32_0 = arith.constant 0 : i32
    return %arg0, %arg1, %arg2, %c0_i32 : i32, i32, i32, i32
  }
  func.func @transform_1(%arg0: i32, %arg1: i32, %arg2: i32) -> (i32, i32, i32, i32) {
    %c0_i32 = arith.constant 0 : i32
    %c0_i32_0 = arith.constant 0 : i32
    %c0_i32_1 = arith.constant 0 : i32
    return %arg0, %arg1, %c0_i32, %c0_i32_0 : i32, i32, i32, i32
  }
  func.func @transform_2(%arg0: i32, %arg1: i32, %arg2: i32) -> (i32, i32, i32, i32) {
    %c0_i32 = arith.constant 0 : i32
    %c0_i32_0 = arith.constant 0 : i32
    %c0_i32_1 = arith.constant 0 : i32
    return %arg0, %arg1, %c0_i32, %c0_i32_0 : i32, i32, i32, i32
  }
  func.func @transform_3(%arg0: i32, %arg1: i32, %arg2: i32) -> (i32, i32, i32, i32) {
    %c0_i32 = arith.constant 0 : i32
    %c0_i32_0 = arith.constant 0 : i32
    return %arg0, %arg1, %arg2, %c0_i32 : i32, i32, i32, i32
  }
  func.func @transform_4(%arg0: i32, %arg1: i32, %arg2: i32) -> (i32, i32, i32, i32) {
    %c0_i32 = arith.constant 0 : i32
    %c0_i32_0 = arith.constant 0 : i32
    return %arg0, %arg1, %arg2, %c0_i32 : i32, i32, i32, i32
  }
}

</mosaic_0001>

<llo_original>
// kernel: tpu_custom_call.1
$region0: #{tpu_custom_call.1}
  #allocation0 [shape = 'u32[]', space=smem, size = 0x4, offset = 0x4, fixed_abs, tag = 'smem constant byte address 0x4 - core index']
  #allocation1 [shape = 'u32[144,128]{1,0:T(1,128)}', space=vmem, size = 0x12000, scoped, tag = 'internal scratch']
  %s0 = inlined_call_operand.vmem [shape: f32[2,2,128,64], index: 0, kind: input, shape index: {}]
  %s1 = inlined_call_operand.vmem [shape: f32[2,2,128,64], index: 1, kind: input, shape index: {}]
  %s2 = inlined_call_operand.vmem [shape: f32[2,2,128,64], index: 2, kind: input, shape index: {}]
  %s3 = inlined_call_operand.vmem [shape: f32[2,2,128,64], index: 3, kind: output, shape index: {0}]
  %s4 = inlined_call_operand.hbm [shape: bf16[2,2,128,128], index: 4, kind: output, shape index: {1}]
  %5 = xla_tuple %s3, %s4
  %s6 = sld [smem:[#allocation0]]
  $region53: #{tpu_custom_call.1} parent=0
    _
  %s8 = ssub.s32 1, %s6
  %s9 = scalar_select 0, %s8, %s6
  $region1: #{tpu_custom_call.1} parent=0
    #allocation2 [shape = 'u8[65536]{0}', space=vmem, size = 0x10000, scoped, tag = 'output window, operand 1']
    #allocation3 [shape = 's32[2]{0}', space=sflag, size = 0x8, scoped, tag = 'scoped memory for tpu_custom_call.1']
    %10 = vsyncpa [#allocation3], 0
    %s11 = scalar_lea.sflag [#allocation3], 1
    %12 = vsyncpa %s11, 0
    loop: start=0, step=1, limit=6
    $region2: #{tpu_custom_call.1} parent=1 // loop_pre_header
      _
    $region3: #{tpu_custom_call.1} parent=1 // loop_header
      %s14 = sphi 0, %s18
      %p15 = scmp.ge.s32.totalorder %s14, 6
      %s21 = sphi 0, %s40
      %s22 = sphi 0, %s36
      %s23 = sphi 0, %s32
      %s24 = sphi 0, %s21
      %s25 = sphi 0, %s22
      %s26 = sphi 0, %s23
      %s27 = sphi 0, %s24
      %s28 = sphi 0, %s25
      %s29 = sphi 0, %s26
      %s47 = sphi 0, %s49
      %s50 = sphi 0, %s47
      %s51 = sphi 0, %s50
      %s67 = sphi 0, %s51
      %s75 = sphi 0, %s77
      %s78 = sphi 0, %s75
      %s79 = sphi 0, %s78
      %s95 = sphi 0, %s79
      %s103 = sphi 0, %s105
      %s106 = sphi 0, %s103
      %s107 = sphi 0, %s106
      %s123 = sphi 0, %s107
      %s133 = sphi 0, %s135
      %s136 = sphi 0, %s133
      %s137 = sphi 0, %s136
      %s153 = sphi 0, %s137
      %s163 = sphi 0, %s165
      %s166 = sphi 0, %s163
      %s167 = sphi 0, %s166
      %s183 = sphi 0, %s167
    $region4: #{tpu_custom_call.1} parent=1 // loop_header_branch
      %17 = sbr.rel (%p15) target = $region8
    $region5: #{tpu_custom_call.1} parent=1 // loop_body
      %s19 = ssub.s32 %s14, 1
      %s20 = ssub.s32 %s14, 2
      %s30 = sadd.s32 1, %s23
      %p31 = scmp.ge.s32.totalorder %s30, 1
      %s32 = scalar_select %p31, 0, %s30
      %s33 = sadd.s32 1, %s22
      %s34 = scalar_select %p31, %s33, %s22
      %p35 = scmp.ge.s32.totalorder %s34, 2
      %s36 = scalar_select %p35, 0, %s34
      %s37 = sadd.s32 1, %s21
      %s38 = scalar_select %p35, %s37, %s21
      %p39 = scmp.ge.s32.totalorder %s38, 2
      %s40 = scalar_select %p39, 0, %s38
      %s41 = ssub.s32 %s21, %s40
      %s42 = ssub.s32 %s22, %s36
      %s43 = sor.u32 %s41, %s42
      %s44 = ssub.s32 %s23, %s32
      %s45 = sor.u32 %s43, %s44
      %p46 = scmp.eq.s32.totalorder %s45, 0
      %s48 = sadd.s32 %s47, 1
      %s49 = scalar_select %p46, %s47, %s48
      %p52 = pneg %p46
      %p53 = scmp.eq.s32.totalorder %s14, 3
      %p54 = por %p52, %p53
      %p55 = scmp.ne.s32.totalorder %s47, %s50
      %p56 = scmp.eq.s32.totalorder %s14, 0
      %p57 = por %p55, %p56
      %p58 = scmp.ne.s32.totalorder %s47, %s50
      %p59 = scmp.eq.s32.totalorder %s19, 3
      %p60 = por %p58, %p59
      %p61 = scmp.ne.s32.totalorder %s50, %s51
      %p62 = scmp.eq.s32.totalorder %s19, 0
      %p63 = por %p61, %p62
      %p64 = scmp.ne.s32.totalorder %s50, %s51
      %p65 = scmp.eq.s32.totalorder %s20, 3
      %p66 = por %p64, %p65
      %p68 = scmp.ne.s32.totalorder %s51, %s67
      %p69 = scmp.eq.s32.totalorder %s20, 0
      %p70 = por %p68, %p69
      %s71 = ssub.s32 %s21, %s40
      %s72 = ssub.s32 %s22, %s36
      %s73 = sor.u32 %s71, %s72
      %p74 = scmp.eq.s32.totalorder %s73, 0
      %s76 = sadd.s32 %s75, 1
      %s77 = scalar_select %p74, %s75, %s76
      %p80 = pneg %p74
      %p81 = scmp.eq.s32.totalorder %s14, 3
      %p82 = por %p80, %p81
      %p83 = scmp.ne.s32.totalorder %s75, %s78
      %p84 = scmp.eq.s32.totalorder %s14, 0
      %p85 = por %p83, %p84
      %p86 = scmp.ne.s32.totalorder %s75, %s78
      %p87 = scmp.eq.s32.totalorder %s19, 3
      %p88 = por %p86, %p87
      %p89 = scmp.ne.s32.totalorder %s78, %s79
      %p90 = scmp.eq.s32.totalorder %s19, 0
      %p91 = por %p89, %p90
      %p92 = scmp.ne.s32.totalorder %s78, %s79
      %p93 = scmp.eq.s32.totalorder %s20, 3
      %p94 = por %p92, %p93
      %p96 = scmp.ne.s32.totalorder %s79, %s95
      %p97 = scmp.eq.s32.totalorder %s20, 0
      %p98 = por %p96, %p97
      %s99 = ssub.s32 %s21, %s40
      %s100 = ssub.s32 %s22, %s36
      %s101 = sor.u32 %s99, %s100
      %p102 = scmp.eq.s32.totalorder %s101, 0
      %s104 = sadd.s32 %s103, 1
      %s105 = scalar_select %p102, %s103, %s104
      %p108 = pneg %p102
      %p109 = scmp.eq.s32.totalorder %s14, 3
      %p110 = por %p108, %p109
      %p111 = scmp.ne.s32.totalorder %s103, %s106
      %p112 = scmp.eq.s32.totalorder %s14, 0
      %p113 = por %p111, %p112
      %p114 = scmp.ne.s32.totalorder %s103, %s106
      %p115 = scmp.eq.s32.totalorder %s19, 3
      %p116 = por %p114, %p115
      %p117 = scmp.ne.s32.totalorder %s106, %s107
      %p118 = scmp.eq.s32.totalorder %s19, 0
      %p119 = por %p117, %p118
      %p120 = scmp.ne.s32.totalorder %s106, %s107
      %p121 = scmp.eq.s32.totalorder %s20, 3
      %p122 = por %p120, %p121
      %p124 = scmp.ne.s32.totalorder %s107, %s123
      %p125 = scmp.eq.s32.totalorder %s20, 0
      %p126 = por %p124, %p125
      %s127 = ssub.s32 %s21, %s40
      %s128 = ssub.s32 %s22, %s36
      %s129 = sor.u32 %s127, %s128
      %s130 = ssub.s32 %s23, %s32
      %s131 = sor.u32 %s129, %s130
      %p132 = scmp.eq.s32.totalorder %s131, 0
      %s134 = sadd.s32 %s133, 1
      %s135 = scalar_select %p132, %s133, %s134
      %p138 = pneg %p132
      %p139 = scmp.eq.s32.totalorder %s14, 3
      %p140 = por %p138, %p139
      %p141 = scmp.ne.s32.totalorder %s133, %s136
      %p142 = scmp.eq.s32.totalorder %s14, 0
      %p143 = por %p141, %p142
      %p144 = scmp.ne.s32.totalorder %s133, %s136
      %p145 = scmp.eq.s32.totalorder %s19, 3
      %p146 = por %p144, %p145
      %p147 = scmp.ne.s32.totalorder %s136, %s137
      %p148 = scmp.eq.s32.totalorder %s19, 0
      %p149 = por %p147, %p148
      %p150 = scmp.ne.s32.totalorder %s136, %s137
      %p151 = scmp.eq.s32.totalorder %s20, 3
      %p152 = por %p150, %p151
      %p154 = scmp.ne.s32.totalorder %s137, %s153
      %p155 = scmp.eq.s32.totalorder %s20, 0
      %p156 = por %p154, %p155
      %s157 = ssub.s32 %s21, %s40
      %s158 = ssub.s32 %s22, %s36
      %s159 = sor.u32 %s157, %s158
      %s160 = ssub.s32 %s23, %s32
      %s161 = sor.u32 %s159, %s160
      %p162 = scmp.eq.s32.totalorder %s161, 0
      %s164 = sadd.s32 %s163, 1
      %s165 = scalar_select %p162, %s163, %s164
      %p168 = pneg %p162
      %p169 = scmp.eq.s32.totalorder %s14, 3
      %p170 = por %p168, %p169
      %p171 = scmp.ne.s32.totalorder %s163, %s166
      %p172 = scmp.eq.s32.totalorder %s14, 0
      %p173 = por %p171, %p172
      %p174 = scmp.ne.s32.totalorder %s163, %s166
      %p175 = scmp.eq.s32.totalorder %s19, 3
      %p176 = por %p174, %p175
      %p177 = scmp.ne.s32.totalorder %s166, %s167
      %p178 = scmp.eq.s32.totalorder %s19, 0
      %p179 = por %p177, %p178
      %p180 = scmp.ne.s32.totalorder %s166, %s167
      %p181 = scmp.eq.s32.totalorder %s20, 3
      %p182 = por %p180, %p181
      %p184 = scmp.ne.s32.totalorder %s167, %s183
      %p185 = scmp.eq.s32.totalorder %s20, 0
      %p186 = por %p184, %p185
      %p187 = scmp.le.s32.totalorder 1, %s14
      %p188 = scmp.lt.s32.totalorder %s14, 5
      %p189 = pnand %p187, %p188
      %p190 = pneg %p189
      // Predicated region
      $region9: #{tpu_custom_call.1} parent=5 // pred_check
        _
      $region10: #{tpu_custom_call.1} parent=5 // pred_check_branch
        %192 = sbr.rel (%p189) target = $region12
      $region11: #{tpu_custom_call.1} parent=5 // pred_region
        %s193 = ssub.s32 %s14, 1
      $region12: #{tpu_custom_call.1} parent=5 // pred_fallthru
        _
      %p194 = scmp.lt.s32.totalorder %s14, 4
      // Predicated region
      $region13: #{tpu_custom_call.1} parent=5 // pred_check
        %p195 = pneg %p194
      $region14: #{tpu_custom_call.1} parent=5 // pred_check_branch
        %197 = sbr.rel (%p195) target = $region16
      $region15: #{tpu_custom_call.1} parent=5 // pred_region
        // Predicated region
        $region17: #{tpu_custom_call.1} parent=15 // pred_check
          %p198 = pneg %p57
        $region18: #{tpu_custom_call.1} parent=15 // pred_check_branch
          %200 = sbr.rel (%p198) target = $region20
        $region19: #{tpu_custom_call.1} parent=15 // pred_region
          %s201 = smul.u32 16, %s23
          %p202 = scmp.lt.s32.totalorder %s21, 1
          %s203 = scalar_select %p202, %s21, 1
          %p204 = scmp.lt.s32.totalorder %s22, 1
          %s205 = scalar_select %p204, %s22, 1
          %p206 = scmp.lt.s32.totalorder %s201, 15
          %s207 = scalar_select %p206, %s201, 15
          %s208 = smul.addr %s205, 16
          %s209 = sadd.s32 %s207, %s208
          %s210 = smul.addr %s203, 32
          %s211 = sadd.s32 %s209, %s210
          %s212 = smul.addr %s211, 8
          %s213 = scalar_lea.vmem %s0, %s212
          %s214 = smul.u32 16, %s23
        $region20: #{tpu_custom_call.1} parent=15 // pred_fallthru
          _
        // Predicated region
        $region21: #{tpu_custom_call.1} parent=15 // pred_check
          %p215 = pneg %p85
        $region22: #{tpu_custom_call.1} parent=15 // pred_check_branch
          %217 = sbr.rel (%p215) target = $region24
        $region23: #{tpu_custom_call.1} parent=15 // pred_region
          %p218 = scmp.lt.s32.totalorder %s21, 1
          %s219 = scalar_select %p218, %s21, 1
          %p220 = scmp.lt.s32.totalorder %s22, 1
          %s221 = scalar_select %p220, %s22, 1
          %s222 = smul.addr %s221, 16
          %s223 = smul.addr %s219, 32
          %s224 = sadd.s32 %s222, %s223
          %s225 = smul.addr %s224, 8
          %s226 = scalar_lea.vmem %s1, %s225
        $region24: #{tpu_custom_call.1} parent=15 // pred_fallthru
          _
        // Predicated region
        $region25: #{tpu_custom_call.1} parent=15 // pred_check
          %p227 = pneg %p113
        $region26: #{tpu_custom_call.1} parent=15 // pred_check_branch
          %229 = sbr.rel (%p227) target = $region28
        $region27: #{tpu_custom_call.1} parent=15 // pred_region
          %p230 = scmp.lt.s32.totalorder %s21, 1
          %s231 = scalar_select %p230, %s21, 1
          %p232 = scmp.lt.s32.totalorder %s22, 1
          %s233 = scalar_select %p232, %s22, 1
          %s234 = smul.addr %s233, 16
          %s235 = smul.addr %s231, 32
          %s236 = sadd.s32 %s234, %s235
          %s237 = smul.addr %s236, 8
          %s238 = scalar_lea.vmem %s2, %s237
        $region28: #{tpu_custom_call.1} parent=15 // pred_fallthru
          _
      $region16: #{tpu_custom_call.1} parent=5 // pred_fallthru
        _
      %p239 = scmp.le.s32.totalorder 1, %s14
      %p240 = scmp.lt.s32.totalorder %s14, 5
      %p241 = pnand %p239, %p240
      %p242 = pneg %p241
      // Predicated region
      $region29: #{tpu_custom_call.1} parent=5 // pred_check
        _
      $region30: #{tpu_custom_call.1} parent=5 // pred_check_branch
        %244 = sbr.rel (%p241) target = $region32
      $region31: #{tpu_custom_call.1} parent=5 // pred_region
        %s245 = ssub.s32 %s14, 1
        %s246 = smul.u32 16, %s26
        %p247 = scmp.lt.s32.totalorder %s24, 1
        %s248 = scalar_select %p247, %s24, 1
        %p249 = scmp.lt.s32.totalorder %s25, 1
        %s250 = scalar_select %p249, %s25, 1
        %p251 = scmp.lt.s32.totalorder %s246, 15
        %s252 = scalar_select %p251, %s246, 15
        %s253 = smul.addr %s250, 16
        %s254 = sadd.s32 %s252, %s253
        %s255 = smul.addr %s248, 32
        %s256 = sadd.s32 %s254, %s255
        %s257 = smul.addr %s256, 8
        %s258 = scalar_lea.vmem %s0, %s257
        %p259 = pneg %p63
        %p260 = pneg %p60
        %p261 = scmp.lt.s32.totalorder %s24, 1
        %s262 = scalar_select %p261, %s24, 1
        %p263 = scmp.lt.s32.totalorder %s25, 1
        %s264 = scalar_select %p263, %s25, 1
        %s265 = smul.addr %s264, 16
        %s266 = smul.addr %s262, 32
        %s267 = sadd.s32 %s265, %s266
        %s268 = smul.addr %s267, 8
        %s269 = scalar_lea.vmem %s1, %s268
        %p270 = pneg %p91
        %p271 = pneg %p88
        %p272 = scmp.lt.s32.totalorder %s24, 1
        %s273 = scalar_select %p272, %s24, 1
        %p274 = scmp.lt.s32.totalorder %s25, 1
        %s275 = scalar_select %p274, %s25, 1
        %s276 = smul.addr %s275, 16
        %s277 = smul.addr %s273, 32
        %s278 = sadd.s32 %s276, %s277
        %s279 = smul.addr %s278, 8
        %s280 = scalar_lea.vmem %s2, %s279
        %p281 = pneg %p119
        %p282 = pneg %p116
        %p283 = pneg %p149
        %p284 = pneg %p146
        %s285 = smul.u32 16, %s26
        %p286 = scmp.lt.s32.totalorder %s24, 1
        %s287 = scalar_select %p286, %s24, 1
        %p288 = scmp.lt.s32.totalorder %s25, 1
        %s289 = scalar_select %p288, %s25, 1
        %p290 = scmp.lt.s32.totalorder %s285, 15
        %s291 = scalar_select %p290, %s285, 15
        %s292 = smul.addr %s289, 16
        %s293 = sadd.s32 %s291, %s292
        %s294 = smul.addr %s287, 32
        %s295 = sadd.s32 %s293, %s294
        %s296 = smul.addr %s295, 8
        %s297 = scalar_lea.vmem %s3, %s296
        %p298 = pneg %p179
        %p299 = pneg %p176
        %s300 = sand.u32 %s166, 1
        %s301 = scalar_lea.sflag [#allocation3], %s300
        %s302 = sand.u32 %s166, 1
        %s303 = smul.addr %s302, 64
        %s304 = scalar_lea.vmem [#allocation2], %s303
        %s305 = smul.u32 16, %s26
        %p306 = scmp.lt.s32.totalorder %s24, 1
        %s307 = scalar_select %p306, %s24, 1
        %p308 = scmp.lt.s32.totalorder %s25, 1
        %s309 = scalar_select %p308, %s25, 1
        %p310 = scmp.lt.s32.totalorder %s305, 15
        %s311 = scalar_select %p310, %s305, 15
        %s312 = smul.addr %s309, 16
        %s313 = sadd.s32 %s311, %s312
        %s314 = smul.addr %s307, 32
        %s315 = sadd.s32 %s313, %s314
        %s316 = smul.addr %s315, 8
        %s317 = scalar_lea.vmem %s0, %s316
        %s318 = smul.u32 16, %s26
        %p319 = scmp.lt.s32.totalorder %s24, 1
        %s320 = scalar_select %p319, %s24, 1
        %p321 = scmp.lt.s32.totalorder %s25, 1
        %s322 = scalar_select %p321, %s25, 1
        %s323 = smul.addr %s322, 16
        %s324 = smul.addr %s320, 32
        %s325 = sadd.s32 %s323, %s324
        %s326 = smul.addr %s325, 8
        %s327 = scalar_lea.vmem %s1, %s326
        %p328 = scmp.lt.s32.totalorder %s24, 1
        %s329 = scalar_select %p328, %s24, 1
        %p330 = scmp.lt.s32.totalorder %s25, 1
        %s331 = scalar_select %p330, %s25, 1
        %s332 = smul.addr %s331, 16
        %s333 = smul.addr %s329, 32
        %s334 = sadd.s32 %s332, %s333
        %s335 = smul.addr %s334, 8
        %s336 = scalar_lea.vmem %s2, %s335
        %s337 = smul.u32 16, %s26
        %p338 = scmp.lt.s32.totalorder %s24, 1
        %s339 = scalar_select %p338, %s24, 1
        %p340 = scmp.lt.s32.totalorder %s25, 1
        %s341 = scalar_select %p340, %s25, 1
        %p342 = scmp.lt.s32.totalorder %s337, 15
        %s343 = scalar_select %p342, %s337, 15
        %s344 = smul.addr %s341, 16
        %s345 = sadd.s32 %s343, %s344
        %s346 = smul.addr %s339, 32
        %s347 = sadd.s32 %s345, %s346
        %s348 = smul.addr %s347, 8
        %s349 = scalar_lea.vmem %s3, %s348
        %s350 = smul.u32 16, %s26
        %s351 = smul.u32 16, %s26
        %v353 = vld [vmem:[%s317] sm:$0xff]
        %v354 = vld [vmem:[%s317 + $0x8] sm:$0xff]
        %v355 = vld [vmem:[%s317 + $0x10] sm:$0xff]
        %v356 = vld [vmem:[%s317 + $0x18] sm:$0xff]
        %v357 = vld [vmem:[%s317 + $0x20] sm:$0xff]
        %v358 = vld [vmem:[%s317 + $0x28] sm:$0xff]
        %v359 = vld [vmem:[%s317 + $0x30] sm:$0xff]
        %v360 = vld [vmem:[%s317 + $0x38] sm:$0xff]
        %v361 = vld [vmem:[%s317 + $0x40] sm:$0xff]
        %v362 = vld [vmem:[%s317 + $0x48] sm:$0xff]
        %v363 = vld [vmem:[%s317 + $0x50] sm:$0xff]
        %v364 = vld [vmem:[%s317 + $0x58] sm:$0xff]
        %v365 = vld [vmem:[%s317 + $0x60] sm:$0xff]
        %v366 = vld [vmem:[%s317 + $0x68] sm:$0xff]
        %v367 = vld [vmem:[%s317 + $0x70] sm:$0xff]
        %v368 = vld [vmem:[%s317 + $0x78] sm:$0xff]
        %v369 = vld [vmem:[%s327] sm:$0xff]
        %v370 = vld [vmem:[%s327 + $0x8] sm:$0xff]
        %v371 = vld [vmem:[%s327 + $0x10] sm:$0xff]
        %v372 = vld [vmem:[%s327 + $0x18] sm:$0xff]
        %v373 = vld [vmem:[%s327 + $0x20] sm:$0xff]
        %v374 = vld [vmem:[%s327 + $0x28] sm:$0xff]
        %v375 = vld [vmem:[%s327 + $0x30] sm:$0xff]
        %v376 = vld [vmem:[%s327 + $0x38] sm:$0xff]
        %v377 = vld [vmem:[%s327 + $0x40] sm:$0xff]
        %v378 = vld [vmem:[%s327 + $0x48] sm:$0xff]
        %v379 = vld [vmem:[%s327 + $0x50] sm:$0xff]
        %v380 = vld [vmem:[%s327 + $0x58] sm:$0xff]
        %v381 = vld [vmem:[%s327 + $0x60] sm:$0xff]
        %v382 = vld [vmem:[%s327 + $0x68] sm:$0xff]
        %v383 = vld [vmem:[%s327 + $0x70] sm:$0xff]
        %v384 = vld [vmem:[%s327 + $0x78] sm:$0xff]
        %v385 = vmul.f32 %v353, 0.125
        %v386 = vmul.f32 %v354, 0.125
        %v387 = vmul.f32 %v355, 0.125
        %v388 = vmul.f32 %v356, 0.125
        %v389 = vmul.f32 %v357, 0.125
        %v390 = vmul.f32 %v358, 0.125
        %v391 = vmul.f32 %v359, 0.125
        %v392 = vmul.f32 %v360, 0.125
        %v393 = vmul.f32 %v361, 0.125
        %v394 = vmul.f32 %v362, 0.125
        %v395 = vmul.f32 %v363, 0.125
        %v396 = vmul.f32 %v364, 0.125
        %v397 = vmul.f32 %v365, 0.125
        %v398 = vmul.f32 %v366, 0.125
        %v399 = vmul.f32 %v367, 0.125
        %v400 = vmul.f32 %v368, 0.125
        %v401 = vpack.c.bf16 %v386, %v385
        %v402 = vpack.c.bf16 %v388, %v387
        %v403 = vpack.c.bf16 %v390, %v389
        %v404 = vpack.c.bf16 %v392, %v391
        %v405 = vpack.c.bf16 %v394, %v393
        %v406 = vpack.c.bf16 %v396, %v395
        %v407 = vpack.c.bf16 %v398, %v397
        %v408 = vpack.c.bf16 %v400, %v399
        %v409 = vpack.c.bf16 %v370, %v369
        %v410 = vpack.c.bf16 %v372, %v371
        %v411 = vpack.c.bf16 %v374, %v373
        %v412 = vpack.c.bf16 %v376, %v375
        %v413 = vpack.c.bf16 %v378, %v377
        %v414 = vpack.c.bf16 %v380, %v379
        %v415 = vpack.c.bf16 %v382, %v381
        %v416 = vpack.c.bf16 %v384, %v383
        %vm417 = vcmask 523264
        %v419 = vsel %vm417, %v401, 0
        %v422 = vsel %vm417, %v402, 0
        %v425 = vsel %vm417, %v403, 0
        %v428 = vsel %vm417, %v404, 0
        %v431 = vsel %vm417, %v405, 0
        %v434 = vsel %vm417, %v406, 0
        %v437 = vsel %vm417, %v407, 0
        %v440 = vsel %vm417, %v408, 0
        %v443 = vsel %vm417, %v409, 0
        %v446 = vsel %vm417, %v410, 0
        %v449 = vsel %vm417, %v411, 0
        %v452 = vsel %vm417, %v412, 0
        %v455 = vsel %vm417, %v413, 0
        %v458 = vsel %vm417, %v414, 0
        %v461 = vsel %vm417, %v415, 0
        %v464 = vsel %vm417, %v416, 0
        %466 = vmatprep.subr.bf16.mxu0 0
        %467 = vmatpush1.bf16.xpose.msra.mxu0 %v443
        %468 = vmatprep.subr.bf16.mxu0 0
        %469 = vmatpush1.bf16.xpose.msra.mxu0 %v446
        %470 = vmatprep.subr.bf16.mxu0 0
        %471 = vmatpush1.bf16.xpose.msra.mxu0 %v449
        %472 = vmatprep.subr.bf16.mxu0 0
        %473 = vmatpush1.bf16.xpose.msra.mxu0 %v452
        %474 = vmatprep.subr.bf16.mxu0 0
        %475 = vmatpush1.bf16.xpose.msra.mxu0 %v455
        %476 = vmatprep.subr.bf16.mxu0 0
        %477 = vmatpush1.bf16.xpose.msra.mxu0 %v458
        %478 = vmatprep.subr.bf16.mxu0 0
        %479 = vmatpush1.bf16.xpose.msra.mxu0 %v461
        %480 = vmatprep.subr.bf16.mxu0 0
        %481 = vmatpush1.bf16.xpose.msra.mxu0 %v464
        %482 = vmatprep.subr.bf16.mxu0 0
        %483 = vmatpush1.bf16.xpose.msra.mxu0 0
        %484 = vmatprep.subr.bf16.mxu0 0
        %485 = vmatpush1.bf16.xpose.msra.mxu0 0
        %486 = vmatprep.subr.bf16.mxu0 0
        %487 = vmatpush1.bf16.xpose.msra.mxu0 0
        %488 = vmatprep.subr.bf16.mxu0 0
        %489 = vmatpush1.bf16.xpose.msra.mxu0 0
        %490 = vmatprep.subr.bf16.mxu0 0
        %491 = vmatpush1.bf16.xpose.msra.mxu0 0
        %492 = vmatprep.subr.bf16.mxu0 0
        %493 = vmatpush1.bf16.xpose.msra.mxu0 0
        %494 = vmatprep.subr.bf16.mxu0 0
        %495 = vmatpush1.bf16.xpose.msra.mxu0 0
        %496 = vmatprep.subr.bf16.mxu0 0
        %497 = vmatpush1.bf16.xpose.msra.mxu0 0
        %498 = vmatprep.mubr.bf16.mxu0 0
        %499 = vmatmul.mubr.bf16.gmra.mrb[0].mxu0 %v419
        %v500 = vpop.f32.mrb[0].mxu0
        %v501 = vadd.f32 0.0, %v500
        %v502 = vpop.f32.mrb[0].mxu0
        %v503 = vpop.f32.mrb[0].mxu0
        %v504 = vadd.f32 0.0, %v503
        %v505 = vpop.f32.mrb[0].mxu0
        %506 = vmatprep.mubr.bf16.mxu0 0
        %507 = vmatmul.mubr.bf16.gmra.mrb[0].mxu0 %v422
        %v508 = vpop.f32.mrb[0].mxu0
        %v509 = vadd.f32 0.0, %v508
        %v510 = vpop.f32.mrb[0].mxu0
        %v511 = vpop.f32.mrb[0].mxu0
        %v512 = vadd.f32 0.0, %v511
        %v513 = vpop.f32.mrb[0].mxu0
        %514 = vmatprep.mubr.bf16.mxu0 0
        %515 = vmatmul.mubr.bf16.gmra.mrb[0].mxu0 %v425
        %v516 = vpop.f32.mrb[0].mxu0
        %v517 = vadd.f32 0.0, %v516
        %v518 = vpop.f32.mrb[0].mxu0
        %v519 = vpop.f32.mrb[0].mxu0
        %v520 = vadd.f32 0.0, %v519
        %v521 = vpop.f32.mrb[0].mxu0
        %522 = vmatprep.mubr.bf16.mxu0 0
        %523 = vmatmul.mubr.bf16.gmra.mrb[0].mxu0 %v428
        %v524 = vpop.f32.mrb[0].mxu0
        %v525 = vadd.f32 0.0, %v524
        %v526 = vpop.f32.mrb[0].mxu0
        %v527 = vpop.f32.mrb[0].mxu0
        %v528 = vadd.f32 0.0, %v527
        %v529 = vpop.f32.mrb[0].mxu0
        %530 = vmatprep.mubr.bf16.mxu0 0
        %531 = vmatmul.mubr.bf16.gmra.mrb[0].mxu0 %v431
        %v532 = vpop.f32.mrb[0].mxu0
        %v533 = vadd.f32 0.0, %v532
        %v534 = vpop.f32.mrb[0].mxu0
        %v535 = vpop.f32.mrb[0].mxu0
        %v536 = vadd.f32 0.0, %v535
        %v537 = vpop.f32.mrb[0].mxu0
        %538 = vmatprep.mubr.bf16.mxu0 0
        %539 = vmatmul.mubr.bf16.gmra.mrb[0].mxu0 %v434
        %v540 = vpop.f32.mrb[0].mxu0
        %v541 = vadd.f32 0.0, %v540
        %v542 = vpop.f32.mrb[0].mxu0
        %v543 = vpop.f32.mrb[0].mxu0
        %v544 = vadd.f32 0.0, %v543
        %v545 = vpop.f32.mrb[0].mxu0
        %546 = vmatprep.mubr.bf16.mxu0 0
        %547 = vmatmul.mubr.bf16.gmra.mrb[0].mxu0 %v437
        %v548 = vpop.f32.mrb[0].mxu0
        %v549 = vadd.f32 0.0, %v548
        %v550 = vpop.f32.mrb[0].mxu0
        %v551 = vpop.f32.mrb[0].mxu0
        %v552 = vadd.f32 0.0, %v551
        %v553 = vpop.f32.mrb[0].mxu0
        %554 = vmatprep.mubr.bf16.mxu0 0
        %555 = vmatmul.mubr.bf16.gmra.mrb[0].mxu0 %v440
        %v556 = vpop.f32.mrb[0].mxu0
        %v557 = vadd.f32 0.0, %v556
        %v558 = vpop.f32.mrb[0].mxu0
        %v559 = vpop.f32.mrb[0].mxu0
        %v560 = vadd.f32 0.0, %v559
        %v561 = vpop.f32.mrb[0].mxu0
        %562 = vdwg.mxu0
        %v563 = vmul.f32 %v501, %v501
        %v564 = vmul.f32 %v504, %v504
        %v565 = vmul.f32 %v509, %v509
        %v566 = vmul.f32 %v512, %v512
        %v567 = vmul.f32 %v517, %v517
        %v568 = vmul.f32 %v520, %v520
        %v569 = vmul.f32 %v525, %v525
        %v570 = vmul.f32 %v528, %v528
        %v571 = vmul.f32 %v533, %v533
        %v572 = vmul.f32 %v536, %v536
        %v573 = vmul.f32 %v541, %v541
        %v574 = vmul.f32 %v544, %v544
        %v575 = vmul.f32 %v549, %v549
        %v576 = vmul.f32 %v552, %v552
        %v577 = vmul.f32 %v557, %v557
        %v578 = vmul.f32 %v560, %v560
        %579 = vadd.xlane.f32.xlu0 %v563
        %v580 = vpop.xlane.xlu0 %579
        %581 = vadd.xlane.f32.xlu0 %v564
        %v582 = vpop.xlane.xlu0 %581
        %583 = vadd.xlane.f32.xlu0 %v565
        %v584 = vpop.xlane.xlu0 %583
        %585 = vadd.xlane.f32.xlu0 %v566
        %v586 = vpop.xlane.xlu0 %585
        %587 = vadd.xlane.f32.xlu0 %v567
        %v588 = vpop.xlane.xlu0 %587
        %589 = vadd.xlane.f32.xlu0 %v568
        %v590 = vpop.xlane.xlu0 %589
        %591 = vadd.xlane.f32.xlu0 %v569
        %v592 = vpop.xlane.xlu0 %591
        %593 = vadd.xlane.f32.xlu0 %v570
        %v594 = vpop.xlane.xlu0 %593
        %595 = vadd.xlane.f32.xlu0 %v571
        %v596 = vpop.xlane.xlu0 %595
        %597 = vadd.xlane.f32.xlu0 %v572
        %v598 = vpop.xlane.xlu0 %597
        %599 = vadd.xlane.f32.xlu0 %v573
        %v600 = vpop.xlane.xlu0 %599
        %601 = vadd.xlane.f32.xlu0 %v574
        %v602 = vpop.xlane.xlu0 %601
        %603 = vadd.xlane.f32.xlu0 %v575
        %v604 = vpop.xlane.xlu0 %603
        %605 = vadd.xlane.f32.xlu0 %v576
        %v606 = vpop.xlane.xlu0 %605
        %607 = vadd.xlane.f32.xlu0 %v577
        %v608 = vpop.xlane.xlu0 %607
        %609 = vadd.xlane.f32.xlu0 %v578
        %v610 = vpop.xlane.xlu0 %609
        %v611 = vmax.f32 %v580, 1e-24
        %v612 = vmax.f32 %v582, 1e-24
        %v613 = vmax.f32 %v584, 1e-24
        %v614 = vmax.f32 %v586, 1e-24
        %v615 = vmax.f32 %v588, 1e-24
        %v616 = vmax.f32 %v590, 1e-24
        %v617 = vmax.f32 %v592, 1e-24
        %v618 = vmax.f32 %v594, 1e-24
        %v619 = vmax.f32 %v596, 1e-24
        %v620 = vmax.f32 %v598, 1e-24
        %v621 = vmax.f32 %v600, 1e-24
        %v622 = vmax.f32 %v602, 1e-24
        %v623 = vmax.f32 %v604, 1e-24
        %v624 = vmax.f32 %v606, 1e-24
        %v625 = vmax.f32 %v608, 1e-24
        %v626 = vmax.f32 %v610, 1e-24
        %v627 = vrsqrt.pop %v611
        %v628 = vrsqrt.pop %v612
        %v629 = vrsqrt.pop %v613
        %v630 = vrsqrt.pop %v614
        %v631 = vrsqrt.pop %v615
        %v632 = vrsqrt.pop %v616
        %v633 = vrsqrt.pop %v617
        %v634 = vrsqrt.pop %v618
        %v635 = vrsqrt.pop %v619
        %v636 = vrsqrt.pop %v620
        %v637 = vrsqrt.pop %v621
        %v638 = vrsqrt.pop %v622
        %v639 = vrsqrt.pop %v623
        %v640 = vrsqrt.pop %v624
        %v641 = vrsqrt.pop %v625
        %v642 = vrsqrt.pop %v626
        %v643 = vmul.f32 %v501, %v627
        %v644 = vmul.f32 %v504, %v628
        %v645 = vmul.f32 %v509, %v629
        %v646 = vmul.f32 %v512, %v630
        %v647 = vmul.f32 %v517, %v631
        %v648 = vmul.f32 %v520, %v632
        %v649 = vmul.f32 %v525, %v633
        %v650 = vmul.f32 %v528, %v634
        %v651 = vmul.f32 %v533, %v635
        %v652 = vmul.f32 %v536, %v636
        %v653 = vmul.f32 %v541, %v637
        %v654 = vmul.f32 %v544, %v638
        %v655 = vmul.f32 %v549, %v639
        %v656 = vmul.f32 %v552, %v640
        %v657 = vmul.f32 %v557, %v641
        %v658 = vmul.f32 %v560, %v642
        %659 = vmax.xlane.f32.xlu0 %v643
        %v660 = vpop.xlane.xlu0 %659
        %661 = vmax.xlane.f32.xlu0 %v644
        %v662 = vpop.xlane.xlu0 %661
        %663 = vmax.xlane.f32.xlu0 %v645
        %v664 = vpop.xlane.xlu0 %663
        %665 = vmax.xlane.f32.xlu0 %v646
        %v666 = vpop.xlane.xlu0 %665
        %667 = vmax.xlane.f32.xlu0 %v647
        %v668 = vpop.xlane.xlu0 %667
        %669 = vmax.xlane.f32.xlu0 %v648
        %v670 = vpop.xlane.xlu0 %669
        %671 = vmax.xlane.f32.xlu0 %v649
        %v672 = vpop.xlane.xlu0 %671
        %673 = vmax.xlane.f32.xlu0 %v650
        %v674 = vpop.xlane.xlu0 %673
        %675 = vmax.xlane.f32.xlu0 %v651
        %v676 = vpop.xlane.xlu0 %675
        %677 = vmax.xlane.f32.xlu0 %v652
        %v678 = vpop.xlane.xlu0 %677
        %679 = vmax.xlane.f32.xlu0 %v653
        %v680 = vpop.xlane.xlu0 %679
        %681 = vmax.xlane.f32.xlu0 %v654
        %v682 = vpop.xlane.xlu0 %681
        %683 = vmax.xlane.f32.xlu0 %v655
        %v684 = vpop.xlane.xlu0 %683
        %685 = vmax.xlane.f32.xlu0 %v656
        %v686 = vpop.xlane.xlu0 %685
        %687 = vmax.xlane.f32.xlu0 %v657
        %v688 = vpop.xlane.xlu0 %687
        %689 = vmax.xlane.f32.xlu0 %v658
        %v690 = vpop.xlane.xlu0 %689
        %v691 = vsub.f32 %v643, %v660
        %v692 = vsub.f32 %v644, %v662
        %v693 = vsub.f32 %v645, %v664
        %v694 = vsub.f32 %v646, %v666
        %v695 = vsub.f32 %v647, %v668
        %v696 = vsub.f32 %v648, %v670
        %v697 = vsub.f32 %v649, %v672
        %v698 = vsub.f32 %v650, %v674
        %v699 = vsub.f32 %v651, %v676
        %v700 = vsub.f32 %v652, %v678
        %v701 = vsub.f32 %v653, %v680
        %v702 = vsub.f32 %v654, %v682
        %v703 = vsub.f32 %v655, %v684
        %v704 = vsub.f32 %v656, %v686
        %v705 = vsub.f32 %v657, %v688
        %v706 = vsub.f32 %v658, %v690
        %v707 = vmul.f32 %v691, 1.442695
        %v708 = vpow.pop %v707
        %v709 = vmul.f32 %v692, 1.442695
        %v710 = vpow.pop %v709
        %v711 = vmul.f32 %v693, 1.442695
        %v712 = vpow.pop %v711
        %v713 = vmul.f32 %v694, 1.442695
        %v714 = vpow.pop %v713
        %v715 = vmul.f32 %v695, 1.442695
        %v716 = vpow.pop %v715
        %v717 = vmul.f32 %v696, 1.442695
        %v718 = vpow.pop %v717
        %v719 = vmul.f32 %v697, 1.442695
        %v720 = vpow.pop %v719
        %v721 = vmul.f32 %v698, 1.442695
        %v722 = vpow.pop %v721
        %v723 = vmul.f32 %v699, 1.442695
        %v724 = vpow.pop %v723
        %v725 = vmul.f32 %v700, 1.442695
        %v726 = vpow.pop %v725
        %v727 = vmul.f32 %v701, 1.442695
        %v728 = vpow.pop %v727
        %v729 = vmul.f32 %v702, 1.442695
        %v730 = vpow.pop %v729
        %v731 = vmul.f32 %v703, 1.442695
        %v732 = vpow.pop %v731
        %v733 = vmul.f32 %v704, 1.442695
        %v734 = vpow.pop %v733
        %v735 = vmul.f32 %v705, 1.442695
        %v736 = vpow.pop %v735
        %v737 = vmul.f32 %v706, 1.442695
        %v738 = vpow.pop %v737
        %739 = vadd.xlane.f32.xlu0 %v708
        %v740 = vpop.xlane.xlu0 %739
        %741 = vadd.xlane.f32.xlu0 %v710
        %v742 = vpop.xlane.xlu0 %741
        %743 = vadd.xlane.f32.xlu0 %v712
        %v744 = vpop.xlane.xlu0 %743
        %745 = vadd.xlane.f32.xlu0 %v714
        %v746 = vpop.xlane.xlu0 %745
        %747 = vadd.xlane.f32.xlu0 %v716
        %v748 = vpop.xlane.xlu0 %747
        %749 = vadd.xlane.f32.xlu0 %v718
        %v750 = vpop.xlane.xlu0 %749
        %751 = vadd.xlane.f32.xlu0 %v720
        %v752 = vpop.xlane.xlu0 %751
        %753 = vadd.xlane.f32.xlu0 %v722
        %v754 = vpop.xlane.xlu0 %753
        %755 = vadd.xlane.f32.xlu0 %v724
        %v756 = vpop.xlane.xlu0 %755
        %757 = vadd.xlane.f32.xlu0 %v726
        %v758 = vpop.xlane.xlu0 %757
        %759 = vadd.xlane.f32.xlu0 %v728
        %v760 = vpop.xlane.xlu0 %759
        %761 = vadd.xlane.f32.xlu0 %v730
        %v762 = vpop.xlane.xlu0 %761
        %763 = vadd.xlane.f32.xlu0 %v732
        %v764 = vpop.xlane.xlu0 %763
        %765 = vadd.xlane.f32.xlu0 %v734
        %v766 = vpop.xlane.xlu0 %765
        %767 = vadd.xlane.f32.xlu0 %v736
        %v768 = vpop.xlane.xlu0 %767
        %769 = vadd.xlane.f32.xlu0 %v738
        %v770 = vpop.xlane.xlu0 %769
        %v771 = vrcp.pop %v740
        %v772 = vrcp.pop %v742
        %v773 = vrcp.pop %v744
        %v774 = vrcp.pop %v746
        %v775 = vrcp.pop %v748
        %v776 = vrcp.pop %v750
        %v777 = vrcp.pop %v752
        %v778 = vrcp.pop %v754
        %v779 = vrcp.pop %v756
        %v780 = vrcp.pop %v758
        %v781 = vrcp.pop %v760
        %v782 = vrcp.pop %v762
        %v783 = vrcp.pop %v764
        %v784 = vrcp.pop %v766
        %v785 = vrcp.pop %v768
        %v786 = vrcp.pop %v770
        %v787 = vmul.f32 %v708, %v771
        %v788 = vmul.f32 %v710, %v772
        %v789 = vmul.f32 %v712, %v773
        %v790 = vmul.f32 %v714, %v774
        %v791 = vmul.f32 %v716, %v775
        %v792 = vmul.f32 %v718, %v776
        %v793 = vmul.f32 %v720, %v777
        %v794 = vmul.f32 %v722, %v778
        %v795 = vmul.f32 %v724, %v779
        %v796 = vmul.f32 %v726, %v780
        %v797 = vmul.f32 %v728, %v781
        %v798 = vmul.f32 %v730, %v782
        %v799 = vmul.f32 %v732, %v783
        %v800 = vmul.f32 %v734, %v784
        %v801 = vmul.f32 %v736, %v785
        %v802 = vmul.f32 %v738, %v786
        %v803 = vpack.c.bf16 %v788, %v787
        %v804 = vpack.c.bf16 %v790, %v789
        %v805 = vpack.c.bf16 %v792, %v791
        %v806 = vpack.c.bf16 %v794, %v793
        %v807 = vpack.c.bf16 %v796, %v795
        %v808 = vpack.c.bf16 %v798, %v797
        %v809 = vpack.c.bf16 %v800, %v799
        %v810 = vpack.c.bf16 %v802, %v801
        %v819 = vunpack.c.l.b16 %v803
        %v820 = vunpack.c.h.b16 %v803
        %v821 = vunpack.c.l.b16 %v804
        %v822 = vunpack.c.h.b16 %v804
        %v823 = vunpack.c.l.b16 %v805
        %v824 = vunpack.c.h.b16 %v805
        %v825 = vunpack.c.l.b16 %v806
        %v826 = vunpack.c.h.b16 %v806
        %v827 = vunpack.c.l.b16 %v807
        %v828 = vunpack.c.h.b16 %v807
        %v829 = vunpack.c.l.b16 %v808
        %v830 = vunpack.c.h.b16 %v808
        %v831 = vunpack.c.l.b16 %v809
        %v832 = vunpack.c.h.b16 %v809
        %v833 = vunpack.c.l.b16 %v810
        %v834 = vunpack.c.h.b16 %v810
        %v835 = vpack.c.b16 %v819, %v819
        %v836 = vpack.c.b16 %v820, %v820
        %v837 = vpack.c.b16 %v821, %v821
        %v838 = vpack.c.b16 %v822, %v822
        %v839 = vpack.c.b16 %v823, %v823
        %v840 = vpack.c.b16 %v824, %v824
        %v841 = vpack.c.b16 %v825, %v825
        %v842 = vpack.c.b16 %v826, %v826
        %v843 = vpack.c.b16 %v827, %v827
        %v844 = vpack.c.b16 %v828, %v828
        %v845 = vpack.c.b16 %v829, %v829
        %v846 = vpack.c.b16 %v830, %v830
        %v847 = vpack.c.b16 %v831, %v831
        %v848 = vpack.c.b16 %v832, %v832
        %v849 = vpack.c.b16 %v833, %v833
        %v850 = vpack.c.b16 %v834, %v834
        %867 = vst [vmem:[%s304] sm:$0xf] %v835
        %868 = vst [vmem:[%s304 + $0x4] sm:$0xf] %v836
        %869 = vst [vmem:[%s304 + $0x8] sm:$0xf] %v837
        %870 = vst [vmem:[%s304 + $0xc] sm:$0xf] %v838
        %871 = vst [vmem:[%s304 + $0x10] sm:$0xf] %v839
        %872 = vst [vmem:[%s304 + $0x14] sm:$0xf] %v840
        %873 = vst [vmem:[%s304 + $0x18] sm:$0xf] %v841
        %874 = vst [vmem:[%s304 + $0x1c] sm:$0xf] %v842
        %875 = vst [vmem:[%s304 + $0x20] sm:$0xf] %v843
        %876 = vst [vmem:[%s304 + $0x24] sm:$0xf] %v844
        %877 = vst [vmem:[%s304 + $0x28] sm:$0xf] %v845
        %878 = vst [vmem:[%s304 + $0x2c] sm:$0xf] %v846
        %879 = vst [vmem:[%s304 + $0x30] sm:$0xf] %v847
        %880 = vst [vmem:[%s304 + $0x34] sm:$0xf] %v848
        %881 = vst [vmem:[%s304 + $0x38] sm:$0xf] %v849
        %882 = vst [vmem:[%s304 + $0x3c] sm:$0xf] %v850
        %v883 = vld [vmem:[%s336] sm:$0xff]
        %v884 = vld [vmem:[%s336 + $0x8] sm:$0xff]
        %v885 = vld [vmem:[%s336 + $0x10] sm:$0xff]
        %v886 = vld [vmem:[%s336 + $0x18] sm:$0xff]
        %v887 = vld [vmem:[%s336 + $0x20] sm:$0xff]
        %v888 = vld [vmem:[%s336 + $0x28] sm:$0xff]
        %v889 = vld [vmem:[%s336 + $0x30] sm:$0xff]
        %v890 = vld [vmem:[%s336 + $0x38] sm:$0xff]
        %v891 = vld [vmem:[%s336 + $0x40] sm:$0xff]
        %v892 = vld [vmem:[%s336 + $0x48] sm:$0xff]
        %v893 = vld [vmem:[%s336 + $0x50] sm:$0xff]
        %v894 = vld [vmem:[%s336 + $0x58] sm:$0xff]
        %v895 = vld [vmem:[%s336 + $0x60] sm:$0xff]
        %v896 = vld [vmem:[%s336 + $0x68] sm:$0xff]
        %v897 = vld [vmem:[%s336 + $0x70] sm:$0xff]
        %v898 = vld [vmem:[%s336 + $0x78] sm:$0xff]
        %v899 = vpack.c.bf16 %v884, %v883
        %v900 = vpack.c.bf16 %v886, %v885
        %v901 = vpack.c.bf16 %v888, %v887
        %v902 = vpack.c.bf16 %v890, %v889
        %v903 = vpack.c.bf16 %v892, %v891
        %v904 = vpack.c.bf16 %v894, %v893
        %v905 = vpack.c.bf16 %v896, %v895
        %v906 = vpack.c.bf16 %v898, %v897
        %907 = vmatprep.subr.bf16.mxu0 0
        %908 = vmatpush1.bf16.msra.mxu0 %v899
        %909 = vmatprep.subr.bf16.mxu0 0
        %910 = vmatpush1.bf16.msra.mxu0 %v900
        %911 = vmatprep.subr.bf16.mxu0 0
        %912 = vmatpush1.bf16.msra.mxu0 %v901
        %913 = vmatprep.subr.bf16.mxu0 0
        %914 = vmatpush1.bf16.msra.mxu0 %v902
        %915 = vmatprep.subr.bf16.mxu0 0
        %916 = vmatpush1.bf16.msra.mxu0 %v903
        %917 = vmatprep.subr.bf16.mxu0 0
        %918 = vmatpush1.bf16.msra.mxu0 %v904
        %919 = vmatprep.subr.bf16.mxu0 0
        %920 = vmatpush1.bf16.msra.mxu0 %v905
        %921 = vmatprep.subr.bf16.mxu0 0
        %922 = vmatpush1.bf16.msra.mxu0 %v906
        %923 = vmatprep.subr.bf16.mxu0 0
        %924 = vmatpush1.bf16.msra.mxu0 0
        %925 = vmatprep.subr.bf16.mxu0 0
        %926 = vmatpush1.bf16.msra.mxu0 0
        %927 = vmatprep.subr.bf16.mxu0 0
        %928 = vmatpush1.bf16.msra.mxu0 0
        %929 = vmatprep.subr.bf16.mxu0 0
        %930 = vmatpush1.bf16.msra.mxu0 0
        %931 = vmatprep.subr.bf16.mxu0 0
        %932 = vmatpush1.bf16.msra.mxu0 0
        %933 = vmatprep.subr.bf16.mxu0 0
        %934 = vmatpush1.bf16.msra.mxu0 0
        %935 = vmatprep.subr.bf16.mxu0 0
        %936 = vmatpush1.bf16.msra.mxu0 0
        %937 = vmatprep.subr.bf16.mxu0 0
        %938 = vmatpush1.bf16.msra.mxu0 0
        %939 = vmatprep.mubr.bf16.mxu0 0
        %940 = vmatmul.mubr.bf16.gmra.mrb[0].mxu0 %v803
        %v941 = vpop.f32.mrb[0].mxu0
        %v942 = vadd.f32 0.0, %v941
        %v943 = vpop.f32.mrb[0].mxu0
        %v944 = vpop.f32.mrb[0].mxu0
        %v945 = vadd.f32 0.0, %v944
        %v946 = vpop.f32.mrb[0].mxu0
        %947 = vmatprep.mubr.bf16.mxu0 0
        %948 = vmatmul.mubr.bf16.gmra.mrb[0].mxu0 %v804
        %v949 = vpop.f32.mrb[0].mxu0
        %v950 = vadd.f32 0.0, %v949
        %v951 = vpop.f32.mrb[0].mxu0
        %v952 = vpop.f32.mrb[0].mxu0
        %v953 = vadd.f32 0.0, %v952
        %v954 = vpop.f32.mrb[0].mxu0
        %955 = vmatprep.mubr.bf16.mxu0 0
        %956 = vmatmul.mubr.bf16.gmra.mrb[0].mxu0 %v805
        %v957 = vpop.f32.mrb[0].mxu0
        %v958 = vadd.f32 0.0, %v957
        %v959 = vpop.f32.mrb[0].mxu0
        %v960 = vpop.f32.mrb[0].mxu0
        %v961 = vadd.f32 0.0, %v960
        %v962 = vpop.f32.mrb[0].mxu0
        %963 = vmatprep.mubr.bf16.mxu0 0
        %964 = vmatmul.mubr.bf16.gmra.mrb[0].mxu0 %v806
        %v965 = vpop.f32.mrb[0].mxu0
        %v966 = vadd.f32 0.0, %v965
        %v967 = vpop.f32.mrb[0].mxu0
        %v968 = vpop.f32.mrb[0].mxu0
        %v969 = vadd.f32 0.0, %v968
        %v970 = vpop.f32.mrb[0].mxu0
        %971 = vmatprep.mubr.bf16.mxu0 0
        %972 = vmatmul.mubr.bf16.gmra.mrb[0].mxu0 %v807
        %v973 = vpop.f32.mrb[0].mxu0
        %v974 = vadd.f32 0.0, %v973
        %v975 = vpop.f32.mrb[0].mxu0
        %v976 = vpop.f32.mrb[0].mxu0
        %v977 = vadd.f32 0.0, %v976
        %v978 = vpop.f32.mrb[0].mxu0
        %979 = vmatprep.mubr.bf16.mxu0 0
        %980 = vmatmul.mubr.bf16.gmra.mrb[0].mxu0 %v808
        %v981 = vpop.f32.mrb[0].mxu0
        %v982 = vadd.f32 0.0, %v981
        %v983 = vpop.f32.mrb[0].mxu0
        %v984 = vpop.f32.mrb[0].mxu0
        %v985 = vadd.f32 0.0, %v984
        %v986 = vpop.f32.mrb[0].mxu0
        %987 = vmatprep.mubr.bf16.mxu0 0
        %988 = vmatmul.mubr.bf16.gmra.mrb[0].mxu0 %v809
        %v989 = vpop.f32.mrb[0].mxu0
        %v990 = vadd.f32 0.0, %v989
        %v991 = vpop.f32.mrb[0].mxu0
        %v992 = vpop.f32.mrb[0].mxu0
        %v993 = vadd.f32 0.0, %v992
        %v994 = vpop.f32.mrb[0].mxu0
        %995 = vmatprep.mubr.bf16.mxu0 0
        %996 = vmatmul.mubr.bf16.gmra.mrb[0].mxu0 %v810
        %v997 = vpop.f32.mrb[0].mxu0
        %v998 = vadd.f32 0.0, %v997
        %v999 = vpop.f32.mrb[0].mxu0
        %v1000 = vpop.f32.mrb[0].mxu0
        %v1001 = vadd.f32 0.0, %v1000
        %v1002 = vpop.f32.mrb[0].mxu0
        %1003 = vdwg.mxu0
        %1004 = vst.msk [vmem:[%s349] sm:$0xff] %vm417, %v942
        %1005 = vst.msk [vmem:[%s349 + $0x8] sm:$0xff] %vm417, %v945
        %1006 = vst.msk [vmem:[%s349 + $0x10] sm:$0xff] %vm417, %v950
        %1007 = vst.msk [vmem:[%s349 + $0x18] sm:$0xff] %vm417, %v953
        %1008 = vst.msk [vmem:[%s349 + $0x20] sm:$0xff] %vm417, %v958
        %1009 = vst.msk [vmem:[%s349 + $0x28] sm:$0xff] %vm417, %v961
        %1010 = vst.msk [vmem:[%s349 + $0x30] sm:$0xff] %vm417, %v966
        %1011 = vst.msk [vmem:[%s349 + $0x38] sm:$0xff] %vm417, %v969
        %1012 = vst.msk [vmem:[%s349 + $0x40] sm:$0xff] %vm417, %v974
        %1013 = vst.msk [vmem:[%s349 + $0x48] sm:$0xff] %vm417, %v977
        %1014 = vst.msk [vmem:[%s349 + $0x50] sm:$0xff] %vm417, %v982
        %1015 = vst.msk [vmem:[%s349 + $0x58] sm:$0xff] %vm417, %v985
        %1016 = vst.msk [vmem:[%s349 + $0x60] sm:$0xff] %vm417, %v990
        %1017 = vst.msk [vmem:[%s349 + $0x68] sm:$0xff] %vm417, %v993
        %1018 = vst.msk [vmem:[%s349 + $0x70] sm:$0xff] %vm417, %v998
        %1019 = vst.msk [vmem:[%s349 + $0x78] sm:$0xff] %vm417, %v1001
        %s1020 = smul.u32 16, %s26
        %p1021 = scmp.lt.s32.totalorder %s24, 1
        %s1022 = scalar_select %p1021, %s24, 1
        %p1023 = scmp.lt.s32.totalorder %s25, 1
        %s1024 = scalar_select %p1023, %s25, 1
        %p1025 = scmp.lt.s32.totalorder %s1020, 15
        %s1026 = scalar_select %p1025, %s1020, 15
        %s1027 = smul.addr %s1024, 16
        %s1028 = sadd.s32 %s1026, %s1027
        %s1029 = smul.addr %s1022, 32
        %s1030 = sadd.s32 %s1028, %s1029
        %s1031 = smul.addr %s1030, 8
        %s1032 = scalar_lea.vmem %s3, %s1031
        %s1033 = sand.u32 %s166, 1
        %s1034 = scalar_lea.sflag [#allocation3], %s1033
        %s1035 = sand.u32 %s166, 1
        %s1036 = smul.addr %s1035, 64
        %s1037 = scalar_lea.vmem [#allocation2], %s1036
        // Predicated region
        $region33: #{tpu_custom_call.1} parent=31 // pred_check
          %p1038 = pneg %p146
        $region34: #{tpu_custom_call.1} parent=31 // pred_check_branch
          %1040 = sbr.rel (%p1038) target = $region36
        $region35: #{tpu_custom_call.1} parent=31 // pred_region
          %s1041 = smul.u32 16, %s26
        $region36: #{tpu_custom_call.1} parent=31 // pred_fallthru
          _
        // Predicated region
        $region37: #{tpu_custom_call.1} parent=31 // pred_check
          %p1042 = pneg %p176
        $region38: #{tpu_custom_call.1} parent=31 // pred_check_branch
          %1044 = sbr.rel (%p1042) target = $region40
        $region39: #{tpu_custom_call.1} parent=31 // pred_region
          %s1045 = smul.u32 16, %s26
          %s1047 = ssub.s32 1024, 1024
          %1048 = vsyncadd %s1034, %s1047
          %s1049 = smul.addr %s25, 16
          %s1050 = sadd.s32 %s1045, %s1049
          %s1051 = smul.addr %s24, 32
          %s1052 = sadd.s32 %s1050, %s1051
          %s1053 = smul.addr %s1052, 64
          %s1054 = scalar_lea.hbm %s4, %s1053
          %s1055 = sshll.u32 %s1037, 4
          %s1056 = int_to_ptr.vmem [resolvable:$true] %s1055
          %1061 = dma.vmem_to_hbm [thread:$0]  %s1056, 1024, %s1054, %s1034, 64, 64, 4
        $region40: #{tpu_custom_call.1} parent=31 // pred_fallthru
          _
      $region32: #{tpu_custom_call.1} parent=5 // pred_fallthru
        _
      %p1062 = scmp.le.s32.totalorder 2, %s14
      // Predicated region
      $region41: #{tpu_custom_call.1} parent=5 // pred_check
        %p1063 = pneg %p1062
      $region42: #{tpu_custom_call.1} parent=5 // pred_check_branch
        %1065 = sbr.rel (%p1063) target = $region44
      $region43: #{tpu_custom_call.1} parent=5 // pred_region
        %s1066 = ssub.s32 %s14, 2
        // Predicated region
        $region45: #{tpu_custom_call.1} parent=43 // pred_check
          %p1067 = pneg %p152
        $region46: #{tpu_custom_call.1} parent=43 // pred_check_branch
          %1069 = sbr.rel (%p1067) target = $region48
        $region47: #{tpu_custom_call.1} parent=43 // pred_region
          %s1070 = smul.u32 16, %s29
          %p1071 = scmp.lt.s32.totalorder %s27, 1
          %s1072 = scalar_select %p1071, %s27, 1
          %p1073 = scmp.lt.s32.totalorder %s28, 1
          %s1074 = scalar_select %p1073, %s28, 1
          %p1075 = scmp.lt.s32.totalorder %s1070, 15
          %s1076 = scalar_select %p1075, %s1070, 15
          %s1077 = smul.addr %s1074, 16
          %s1078 = sadd.s32 %s1076, %s1077
          %s1079 = smul.addr %s1072, 32
          %s1080 = sadd.s32 %s1078, %s1079
          %s1081 = smul.addr %s1080, 8
          %s1082 = scalar_lea.vmem %s3, %s1081
        $region48: #{tpu_custom_call.1} parent=43 // pred_fallthru
          _
        // Predicated region
        $region49: #{tpu_custom_call.1} parent=43 // pred_check
          %p1083 = pneg %p182
        $region50: #{tpu_custom_call.1} parent=43 // pred_check_branch
          %1085 = sbr.rel (%p1083) target = $region52
        $region51: #{tpu_custom_call.1} parent=43 // pred_region
          %s1086 = sand.u32 %s167, 1
          %s1087 = scalar_lea.sflag [#allocation3], %s1086
          %s1088 = sand.u32 %s167, 1
          %s1089 = smul.addr %s1088, 64
          %s1090 = scalar_lea.vmem [#allocation2], %s1089
          %1091 = dma.done %s1087, 1024
        $region52: #{tpu_custom_call.1} parent=43 // pred_fallthru
          _
      $region44: #{tpu_custom_call.1} parent=5 // pred_fallthru
        _
    $region6: #{tpu_custom_call.1} parent=1 // loop_footer
      %s18 = sadd.s32 1, %s14
    $region7: #{tpu_custom_call.1} parent=1 // loop_footer_branch
      %13 = sbr.rel target = $region3
    $region8: #{tpu_custom_call.1} parent=1 // loop_exit
      _
    %1092 = vsyncpa [#allocation3], 1
    %s1093 = scalar_lea.sflag [#allocation3], 1
    %1094 = vsyncpa %s1093, 1

</llo_original>
